<compile_context>
chip_gen: v7x
topology: tpu7x:2x2x1
jax: 0.10.0
libtpu: 0.0.40
codegen_flags: <defaults>
</compile_context>

<pallas_src>
import functools

import jax
import jax.numpy as jnp
from jax.experimental import pallas as pl
from jax.experimental.pallas import tpu as pltpu


def _focal_loss_kernel(logits_ref, targets_ref, out_ref, *,
                       gamma, rows_valid, total_blocks, steps, tm, tn,
                       assume_binary_targets):
    g = pl.program_id(0)
    s = pl.program_id(1)

    @pl.when(s == 0)
    def _():
        out_ref[...] = jnp.zeros_like(out_ref)

    # Stream native dtype from HBM; cast to f32 in VMEM.
    x = logits_ref[...].astype(jnp.float32)
    t = targets_ref[...].astype(jnp.float32)

    if assume_binary_targets:
        # t in {0,1}: pt = sigmoid((2t-1)*x); 2 EUP pushes + one approx recip
        # instead of 3 EUP pushes on the generic path (v5e EUP relief).
        z = x * (1.0 - 2.0 * t)
        pt = pl.reciprocal(1.0 + jnp.exp(z), approx=True)
        bce = -jnp.log(pt)
    else:
        # Numerically-stable BCEWithLogitsLoss (reduction='none'), as PyTorch:
        #   bce = max(x, 0) - x*t + log1p(exp(-|x|))
        bce = jnp.maximum(x, 0.0) - x * t + jnp.log1p(jnp.exp(-jnp.abs(x)))
        pt = jnp.exp(-bce)

    omp = 1.0 - pt

    if float(gamma) == int(gamma) and int(gamma) >= 1:
        # Integer gamma: gamma-1 explicit multiplies (no pow on the EUP).
        mod = omp
        for _ in range(int(gamma) - 1):
            mod = mod * omp
    elif float(gamma) == 0.0:
        mod = jnp.ones_like(omp)
    else:
        mod = omp ** gamma

    focal = mod * bce                  # alpha is applied outside the kernel

    block_idx = g * steps + s
    is_interior = block_idx < (total_blocks - 1)

    def _accumulate(vals):
        # Keep the per-step reduction in vreg layout: (tm,128)->(tm/8,8,128)
        # summed over the leading axis is pure VPU adds into the resident
        # output block; the tiny cross-lane reduce happens outside the kernel.
        partial = jnp.sum(vals.reshape(tm // 8, 8, tn), axis=0)
        out_ref[...] += partial[None, :, :]

    @pl.when(is_interior)
    def _():
        # Interior (guaranteed-full) block: no mask machinery at all.
        _accumulate(focal)

    @pl.when(jnp.logical_not(is_interior))
    def _():
        # Edge block (Pallas partial-block padding) or clamped overflow block.
        # The select is load-bearing: it also discards NaN/Inf produced by
        # garbage lanes before they can poison the accumulator.
        row0 = block_idx * tm
        row_ids = jax.lax.broadcasted_iota(jnp.int32, (tm, tn), 0) + row0
        _accumulate(jnp.where(row_ids < rows_valid, focal, 0.0))


def _focal_elems_jax(x, t, gamma):
    """Plain-JAX per-element focal value WITHOUT alpha (same math as kernel)."""
    x = x.astype(jnp.float32)
    t = t.astype(jnp.float32)
    bce = jnp.maximum(x, 0.0) - x * t + jnp.log1p(jnp.exp(-jnp.abs(x)))
    omp = 1.0 - jnp.exp(-bce)
    return (omp ** gamma) * bce


def _round_up(x, m):
    return ((x + m - 1) // m) * m


@functools.lru_cache(maxsize=1)
def _num_tensorcores():
    """Best-effort TensorCore count (v7x: 2/chip, v5e/v6e: 1/chip)."""
    try:
        info = pltpu.get_tpu_info()
    except Exception:
        return 1
    for attr in ("num_tensorcores", "tensorcore_count", "tensorcores_per_chip",
                 "num_cores_per_chip", "num_cores", "core_count"):
        v = getattr(info, attr, None)
        if v is None:
            continue
        try:
            v = int(v)
        except Exception:
            continue
        if v >= 1:
            return v
    # Heuristic: v7x exposes 64 MiB VMEM per TensorCore (2 TCs/chip);
    # v5e/v6e expose 128 MiB (1 TC/chip).
    vmem = getattr(info, "vmem_capacity_bytes", None)
    try:
        if vmem is not None and 0 < int(vmem) <= 64 * 1024 * 1024:
            return 2
    except Exception:
        pass
    return 1


def focal_loss(logits, targets, *, alpha=0.75, gamma=2.0, tm=8192, tn=128,
               assume_binary_targets=False):
    """Focal loss matching the PyTorch FocalLoss module (mean reduction).

    Perf notes: jit the caller (lets XLA elide the contiguous prefix slice for
    ragged sizes), and feed narrow producer dtypes (bf16 logits, bf16/int8
    targets) — the kernel casts to f32 in VMEM, so narrower HBM streams are a
    direct bandwidth win on v5e/v6e.
    """
    assert logits.shape == targets.shape
    n = logits.size
    flat_l = logits.reshape(-1)
    flat_t = targets.reshape(-1)

    rows, n_tail = divmod(n, tn)
    n_prefix = rows * tn

    if rows < 8:
        # Too small for a (8,128)-tiled kernel: plain JAX.
        total = jnp.sum(_focal_elems_jax(flat_l, flat_t, gamma))
        return jnp.float32(alpha) * total / jnp.float32(n)

    if n_tail:
        # Sub-128 ragged tail: fold it in with plain JAX (< 128 elements)
        # instead of jnp.pad-ing (and re-copying) the full streams.
        tail_sum = jnp.sum(
            _focal_elems_jax(flat_l[n_prefix:], flat_t[n_prefix:], gamma))
        flat_l = flat_l[:n_prefix]     # contiguous prefix (offset 0)
        flat_t = flat_t[:n_prefix]
    else:
        tail_sum = jnp.float32(0.0)

    l2 = flat_l.reshape(rows, tn)
    t2 = flat_t.reshape(rows, tn)

    # Row-tile: as large as possible (amortizes ~0.35us/grid-step overhead)
    # while keeping 2 streams x 2 pipeline buffers inside the 32 MiB scoped
    # VMEM budget (tm=8192 -> 16 MiB). Multiple of 8 (f32 sublane); rounded to
    # a multiple of 32 when possible for bf16/int8 sublane packing.
    tm_eff = max(8, min(int(tm), (rows // 8) * 8))
    if tm_eff >= 32:
        tm_eff -= tm_eff % 32

    total_blocks = pl.cdiv(rows, tm_eff)
    # Leading "parallel" chunk axis feeds both v7x TensorCores; on single-TC
    # v5e/v6e a single chunk avoids the extra clamped overflow grid step.
    num_chunks = 2 if (total_blocks >= 2 and _num_tensorcores() >= 2) else 1
    steps = pl.cdiv(total_blocks, num_chunks)

    def in_index_map(g, s):
        # Clamp so a (rare) overflow step of the last chunk re-reads a valid
        # block; its contribution is masked to zero inside the kernel.
        return (jnp.minimum(g * steps + s, total_blocks - 1), 0)

    kernel = functools.partial(
        _focal_loss_kernel,
        gamma=float(gamma), rows_valid=rows, total_blocks=int(total_blocks),
        steps=int(steps), tm=tm_eff, tn=tn,
        assume_binary_targets=bool(assume_binary_targets))

    partials = pl.pallas_call(
        kernel,
        out_shape=jax.ShapeDtypeStruct((num_chunks, 8, tn), jnp.float32),
        grid_spec=pltpu.PrefetchScalarGridSpec(
            num_scalar_prefetch=0,
            grid=(num_chunks, steps),
            in_specs=[
                pl.BlockSpec((tm_eff, tn), in_index_map),
                pl.BlockSpec((tm_eff, tn), in_index_map),
            ],
            out_specs=pl.BlockSpec((1, 8, tn), lambda g, s: (g, 0, 0)),
        ),
        compiler_params=pltpu.CompilerParams(
            dimension_semantics=("parallel", "arbitrary"),
            vmem_limit_bytes=32 * 1024 * 1024,
        ),
    )(l2, t2)

    total = jnp.sum(partials) + tail_sum
    return jnp.float32(alpha) * total / jnp.float32(n)


def _focal_loss_ref(logits, targets, alpha=0.75, gamma=2.0):
    """Pure-JAX reference mirroring the PyTorch module."""
    x = logits.astype(jnp.float32)
    t = targets.astype(jnp.float32)
    bce = jnp.maximum(x, 0.0) - x * t + jnp.log1p(jnp.exp(-jnp.abs(x)))
    pt = jnp.exp(-bce)
    return jnp.mean(alpha * (1.0 - pt) ** gamma * bce)


if __name__ == "__main__":
    key = jax.random.PRNGKey(0)
    k1, k2, k3, k4 = jax.random.split(key, 4)

    # Small NCHW-shaped synthetic inputs: logits and binary targets.
    B, C, H, W = 2, 4, 16, 16
    logits = jax.random.normal(k1, (B, C, H, W), dtype=jnp.float32) * 2.0
    targets = (jax.random.uniform(k2, (B, C, H, W)) > 0.5).astype(jnp.float32)

    out = jax.block_until_ready(focal_loss(logits, targets, alpha=0.75, gamma=2.0))
    ref = _focal_loss_ref(logits, targets, alpha=0.75, gamma=2.0)
    assert jnp.allclose(out, ref, rtol=1e-4, atol=1e-6), (out, ref)

    # Ragged size (not a multiple of 128): exercises the plain-JAX tail path
    # plus the masked edge block of the multiple-of-128 prefix (no jnp.pad).
    shape2 = (2, 3, 15, 17)
    logits2 = jax.random.normal(k3, shape2, dtype=jnp.float32) * 2.0
    targets2 = (jax.random.uniform(k4, shape2) > 0.5).astype(jnp.float32)
    out2 = jax.block_until_ready(focal_loss(logits2, targets2))
    ref2 = _focal_loss_ref(logits2, targets2)
    assert jnp.allclose(out2, ref2, rtol=1e-4, atol=1e-6), (out2, ref2)

    # Tiny tm forces a multi-block grid: exercises the interior (unmasked)
    # accumulate path, the masked edge block, sequential accumulation, and
    # (on multi-TensorCore chips) the parallel chunk axis + clamped overflow.
    shape3 = (2, 4, 24, 16)
    logits3 = jax.random.normal(k1, shape3, dtype=jnp.float32) * 2.0
    targets3 = (jax.random.uniform(k2, shape3) > 0.5).astype(jnp.float32)
    out3 = jax.block_until_ready(focal_loss(logits3, targets3, tm=8))
    ref3 = _focal_loss_ref(logits3, targets3)
    assert jnp.allclose(out3, ref3, rtol=1e-4, atol=1e-6), (out3, ref3)

    print("KERNEL_OK")
</pallas_src>

<mosaic_0001>
module attributes {stable_mosaic.version = 11 : i64} {
  func.func @_focal_loss_kernel(%arg0: i32, %arg1: i32, %arg2: memref<16x128xf32, #tpu.memory_space<vmem>>, %arg3: memref<16x128xf32, #tpu.memory_space<vmem>>, %arg4: memref<1x8x128xf32, #tpu.memory_space<vmem>>) attributes {dimension_semantics = [#tpu.dimension_semantics<parallel>, #tpu.dimension_semantics<arbitrary>], iteration_bounds = array<i64: 1, 1>, scalar_prefetch = 0 : i64, scratch_operands = 0 : i64, tpu.core_type = #tpu.core_type<tc>, window_params = [{transform_indices = @transform_0, window_bounds = array<i64: 16, 128>}, {transform_indices = @transform_1, window_bounds = array<i64: 16, 128>}, {transform_indices = @transform_2, window_bounds = array<i64: 1, 8, 128>}]} {
    %c0_i32 = arith.constant 0 : i32
    %0 = arith.cmpi eq, %arg1, %c0_i32 : i32
    %1 = arith.extui %0 : i1 to i32
    %c0_i32_0 = arith.constant 0 : i32
    %2 = arith.cmpi ne, %1, %c0_i32_0 : i32
    scf.if %2 {
      %cst_10 = arith.constant 0.000000e+00 : f32
      %30 = vector.broadcast %cst_10 : f32 to vector<1x8x128xf32>
      %c0_11 = arith.constant 0 : index
      %c0_12 = arith.constant 0 : index
      %c0_13 = arith.constant 0 : index
      %31 = vector.load %arg4[%c0_11, %c0_12, %c0_13] : memref<1x8x128xf32, #tpu.memory_space<vmem>>, vector<1x8x128xf32>
      tpu.vector_store %arg4[%c0_11, %c0_12, %c0_13], %30 {strides = array<i32>} : memref<1x8x128xf32, #tpu.memory_space<vmem>>, vector<1x8x128xf32>,
    } else {
    }
    %c0 = arith.constant 0 : index
    %c0_1 = arith.constant 0 : index
    %3 = vector.load %arg2[%c0, %c0_1] : memref<16x128xf32, #tpu.memory_space<vmem>>, vector<16x128xf32>
    %c0_2 = arith.constant 0 : index
    %c0_3 = arith.constant 0 : index
    %4 = vector.load %arg3[%c0_2, %c0_3] : memref<16x128xf32, #tpu.memory_space<vmem>>, vector<16x128xf32>
    %cst = arith.constant 0.000000e+00 : f32
    %5 = vector.broadcast %cst : f32 to vector<16x128xf32>
    %6 = arith.maximumf %3, %5 : vector<16x128xf32>
    %7 = arith.mulf %3, %4 : vector<16x128xf32>
    %8 = arith.subf %6, %7 : vector<16x128xf32>
    %9 = math.absf %3 : vector<16x128xf32>
    %cst_4 = arith.constant 0.000000e+00 : f32
    %10 = vector.broadcast %cst_4 : f32 to vector<16x128xf32>
    %11 = arith.subf %10, %9 : vector<16x128xf32>
    %12 = math.exp %11 : vector<16x128xf32>
    %13 = math.log1p %12 : vector<16x128xf32>
    %14 = arith.addf %8, %13 : vector<16x128xf32>
    %cst_5 = arith.constant 0.000000e+00 : f32
    %15 = vector.broadcast %cst_5 : f32 to vector<16x128xf32>
    %16 = arith.subf %15, %14 : vector<16x128xf32>
    %17 = math.exp %16 : vector<16x128xf32>
    %cst_6 = arith.constant 1.000000e+00 : f32
    %18 = vector.broadcast %cst_6 : f32 to vector<16x128xf32>
    %19 = arith.subf %18, %17 : vector<16x128xf32>
    %20 = arith.mulf %19, %19 : vector<16x128xf32>
    %21 = arith.mulf %20, %14 : vector<16x128xf32>
    %c1_i32 = arith.constant 1 : i32
    %22 = arith.muli %arg0, %c1_i32 : i32
    %23 = arith.addi %22, %arg1 : i32
    %c0_i32_7 = arith.constant 0 : i32
    %24 = arith.cmpi slt, %23, %c0_i32_7 : i32
    %25 = arith.extui %24 : i1 to i32
    %c0_i32_8 = arith.constant 0 : i32
    %26 = arith.cmpi ne, %25, %c0_i32_8 : i32
    scf.if %26 {
      %30 = vector.shape_cast %21 : vector<16x128xf32> to vector<2x8x128xf32>
      %cst_10 = arith.constant dense<0.000000e+00> : vector<8x128xf32>
      %31 = vector.multi_reduction <add>, %30, %cst_10 [0] : vector<2x8x128xf32> to vector<8x128xf32>
      %c0_11 = arith.constant 0 : index
      %c0_12 = arith.constant 0 : index
      %c0_13 = arith.constant 0 : index
      %32 = vector.load %arg4[%c0_11, %c0_12, %c0_13] : memref<1x8x128xf32, #tpu.memory_space<vmem>>, vector<1x8x128xf32>
      %33 = vector.shape_cast %31 : vector<8x128xf32> to vector<1x8x128xf32>
      %34 = arith.addf %32, %33 : vector<1x8x128xf32>
      %c0_14 = arith.constant 0 : index
      %c0_15 = arith.constant 0 : index
      %c0_16 = arith.constant 0 : index
      %35 = vector.load %arg4[%c0_14, %c0_15, %c0_16] : memref<1x8x128xf32, #tpu.memory_space<vmem>>, vector<1x8x128xf32>
      tpu.vector_store %arg4[%c0_14, %c0_15, %c0_16], %34 {strides = array<i32>} : memref<1x8x128xf32, #tpu.memory_space<vmem>>, vector<1x8x128xf32>,
    } else {
    }
    %true = arith.constant true
    %27 = arith.xori %24, %true : i1
    %28 = arith.extui %27 : i1 to i32
    %c0_i32_9 = arith.constant 0 : i32
    %29 = arith.cmpi ne, %28, %c0_i32_9 : i32
    scf.if %29 {
      %c16_i32 = arith.constant 16 : i32
      %30 = arith.muli %23, %c16_i32 : i32
      %31 = tpu.iota {dimensions = array<i32: 0>} : vector<16x128xi32>
      %32 = vector.broadcast %30 : i32 to vector<16x128xi32>
      %33 = arith.addi %31, %32 : vector<16x128xi32>
      %c16_i32_10 = arith.constant 16 : i32
      %34 = vector.broadcast %c16_i32_10 : i32 to vector<16x128xi32>
      %35 = arith.cmpi slt, %33, %34 : vector<16x128xi32>
      %cst_11 = arith.constant 0.000000e+00 : f32
      %36 = vector.broadcast %cst_11 : f32 to vector<16x128xf32>
      %37 = arith.select %35, %21, %36 : vector<16x128xi1>, vector<16x128xf32>
      %38 = vector.shape_cast %37 : vector<16x128xf32> to vector<2x8x128xf32>
      %cst_12 = arith.constant dense<0.000000e+00> : vector<8x128xf32>
      %39 = vector.multi_reduction <add>, %38, %cst_12 [0] : vector<2x8x128xf32> to vector<8x128xf32>
      %c0_13 = arith.constant 0 : index
      %c0_14 = arith.constant 0 : index
      %c0_15 = arith.constant 0 : index
      %40 = vector.load %arg4[%c0_13, %c0_14, %c0_15] : memref<1x8x128xf32, #tpu.memory_space<vmem>>, vector<1x8x128xf32>
      %41 = vector.shape_cast %39 : vector<8x128xf32> to vector<1x8x128xf32>
      %42 = arith.addf %40, %41 : vector<1x8x128xf32>
      %c0_16 = arith.constant 0 : index
      %c0_17 = arith.constant 0 : index
      %c0_18 = arith.constant 0 : index
      %43 = vector.load %arg4[%c0_16, %c0_17, %c0_18] : memref<1x8x128xf32, #tpu.memory_space<vmem>>, vector<1x8x128xf32>
      tpu.vector_store %arg4[%c0_16, %c0_17, %c0_18], %42 {strides = array<i32>} : memref<1x8x128xf32, #tpu.memory_space<vmem>>, vector<1x8x128xf32>,
    } else {
    }
    return
  }
  func.func @transform_0(%arg0: i32, %arg1: i32) -> (i32, i32) {
    %c1_i32 = arith.constant 1 : i32
    %0 = arith.muli %arg0, %c1_i32 : i32
    %1 = arith.addi %0, %arg1 : i32
    %c0_i32 = arith.constant 0 : i32
    %2 = arith.minsi %1, %c0_i32 : i32
    %c0_i32_0 = arith.constant 0 : i32
    %c0_i32_1 = arith.constant 0 : i32
    return %2, %c0_i32_0 : i32, i32
  }
  func.func @transform_1(%arg0: i32, %arg1: i32) -> (i32, i32) {
    %c1_i32 = arith.constant 1 : i32
    %0 = arith.muli %arg0, %c1_i32 : i32
    %1 = arith.addi %0, %arg1 : i32
    %c0_i32 = arith.constant 0 : i32
    %2 = arith.minsi %1, %c0_i32 : i32
    %c0_i32_0 = arith.constant 0 : i32
    %c0_i32_1 = arith.constant 0 : i32
    return %2, %c0_i32_0 : i32, i32
  }
  func.func @transform_2(%arg0: i32, %arg1: i32) -> (i32, i32, i32) {
    %c0_i32 = arith.constant 0 : i32
    %c0_i32_0 = arith.constant 0 : i32
    %c0_i32_1 = arith.constant 0 : i32
    return %arg0, %c0_i32, %c0_i32_0 : i32, i32, i32
  }
}

</mosaic_0001>

<llo_original>
// kernel: tpu_custom_call.1
$region0: #{tpu_custom_call.1}
  #allocation0 [shape = 'u32[]', space=smem, size = 0x4, offset = 0x4, fixed_abs, tag = 'smem constant byte address 0x4 - core index']
  #allocation1 [shape = 'u32[144,128]{1,0:T(1,128)}', space=vmem, size = 0x12000, scoped, tag = 'internal scratch']
  %s0 = inlined_call_operand.hbm [shape: f32[16,128], index: 0, kind: input, shape index: {}]
  %s1 = inlined_call_operand.hbm [shape: f32[16,128], index: 1, kind: input, shape index: {}]
  %s2 = inlined_call_operand.hbm [shape: f32[1,8,128], index: 2, kind: output, shape index: {}]
  %s3 = sld [smem:[#allocation0]]
  $region38: #{tpu_custom_call.1} parent=0
    _
  %s5 = ssub.s32 1, %s3
  %s6 = scalar_select 0, %s5, %s3
  $region1: #{tpu_custom_call.1} parent=0
    #allocation2 [shape = 'u8[8192]{0}', space=vmem, size = 0x2000, scoped, tag = 'input window, operand 0, single buffered']
    #allocation3 [shape = 's32[1]{0}', space=sflag, size = 0x4, scoped, tag = 'scoped memory for tpu_custom_call.1']
    #allocation4 [shape = 's32[1]{0}', space=sflag, size = 0x4, scoped, tag = 'scoped memory for tpu_custom_call.1']
    #allocation5 [shape = 'u8[8192]{0}', space=vmem, size = 0x2000, scoped, tag = 'input window, operand 1, single buffered']
    #allocation6 [shape = 's32[1]{0}', space=sflag, size = 0x4, scoped, tag = 'scoped memory for tpu_custom_call.1']
    #allocation7 [shape = 'u8[4096]{0}', space=vmem, size = 0x1000, scoped, tag = 'output window, operand 0, single buffered']
    %7 = vsyncpa [#allocation3], 0
    %8 = vsyncpa [#allocation6], 0
    %9 = vsyncpa [#allocation4], 0
    // Predicated region
    $region2: #{tpu_custom_call.1} parent=1 // pred_check
      _
    $region3: #{tpu_custom_call.1} parent=1 // pred_check_branch
      %11 = sbr.rel (0) target = $region5
    $region4: #{tpu_custom_call.1} parent=1 // pred_region
      %s12 = sadd.s32 0, 0
      %p13 = scmp.lt.s32.totalorder %s12, 0
      %s14 = scalar_select %p13, %s12, 0
      %s15 = smul.u32 2, %s14
      %s17 = ssub.s32 256, 256
      %18 = vsyncadd [#allocation3], %s17
      %s19 = smul.addr %s15, 128
      %s20 = scalar_lea.hbm %s0, %s19
      %s21 = sshll.u32 [#allocation2], 4
      %s22 = int_to_ptr.vmem [resolvable:$true] %s21
      %27 = dma.hbm_to_vmem [thread:$0]  %s20, 256, %s22, [#allocation3], 128, 128, 8
    $region5: #{tpu_custom_call.1} parent=1 // pred_fallthru
      _
    // Predicated region
    $region6: #{tpu_custom_call.1} parent=1 // pred_check
      _
    $region7: #{tpu_custom_call.1} parent=1 // pred_check_branch
      %29 = sbr.rel (0) target = $region9
    $region8: #{tpu_custom_call.1} parent=1 // pred_region
      %s30 = sadd.s32 0, 0
      %p31 = scmp.lt.s32.totalorder %s30, 0
      %s32 = scalar_select %p31, %s30, 0
      %s33 = smul.u32 2, %s32
      %s35 = ssub.s32 256, 256
      %36 = vsyncadd [#allocation6], %s35
      %s37 = smul.addr %s33, 128
      %s38 = scalar_lea.hbm %s1, %s37
      %s39 = sshll.u32 [#allocation5], 4
      %s40 = int_to_ptr.vmem [resolvable:$true] %s39
      %45 = dma.hbm_to_vmem [thread:$0]  %s38, 256, %s40, [#allocation6], 128, 128, 8
    $region9: #{tpu_custom_call.1} parent=1 // pred_fallthru
      _
    // Predicated region
    $region10: #{tpu_custom_call.1} parent=1 // pred_check
      _
    $region11: #{tpu_custom_call.1} parent=1 // pred_check_branch
      %47 = sbr.rel (0) target = $region13
    $region12: #{tpu_custom_call.1} parent=1 // pred_region
      %48 = dma.done [#allocation3], 256
    $region13: #{tpu_custom_call.1} parent=1 // pred_fallthru
      _
    // Predicated region
    $region14: #{tpu_custom_call.1} parent=1 // pred_check
      _
    $region15: #{tpu_custom_call.1} parent=1 // pred_check_branch
      %50 = sbr.rel (0) target = $region17
    $region16: #{tpu_custom_call.1} parent=1 // pred_region
      %51 = dma.done [#allocation6], 256
    $region17: #{tpu_custom_call.1} parent=1 // pred_fallthru
      _
    %s52 = sadd.s32 0, 0
    %p53 = scmp.lt.s32.totalorder %s52, 0
    %s54 = scalar_select %p53, %s52, 0
    %s55 = smul.u32 2, %s54
    %s56 = sadd.s32 0, 0
    %p57 = scmp.lt.s32.totalorder %s56, 0
    %s58 = scalar_select %p57, %s56, 0
    %s59 = smul.u32 2, %s58
    %p60 = scmp.eq.s32.totalorder 0, 0
    // Predicated region
    $region18: #{tpu_custom_call.1} parent=1 // pred_check
      %p61 = pneg %p60
    $region19: #{tpu_custom_call.1} parent=1 // pred_check_branch
      %63 = sbr.rel (%p61) target = $region21
    $region20: #{tpu_custom_call.1} parent=1 // pred_region
      %64 = vst [vmem:[#allocation7] sm:$0xff] 0.0
    $region21: #{tpu_custom_call.1} parent=1 // pred_fallthru
      _
    %v65 = vld [vmem:[#allocation2] sm:$0xff]
    %v66 = vld [vmem:[#allocation2 + $0x8] sm:$0xff]
    %v67 = vld [vmem:[#allocation5] sm:$0xff]
    %v68 = vld [vmem:[#allocation5 + $0x8] sm:$0xff]
    %v69 = vmax.f32 %v65, 0.0
    %v70 = vmax.f32 %v66, 0.0
    %v71 = vmul.f32 %v65, %v67
    %v72 = vmul.f32 %v66, %v68
    %v73 = vsub.f32 %v69, %v71
    %v74 = vsub.f32 %v70, %v72
    %v75 = vand.u32 2147483647, %v65
    %v76 = vand.u32 2147483647, %v66
    %v77 = vsub.f32 0.0, %v75
    %v78 = vsub.f32 0.0, %v76
    %v79 = vmul.f32 %v77, 1.442695
    %v80 = vpow.pop %v79
    %v81 = vmul.f32 %v78, 1.442695
    %v82 = vpow.pop %v81
    %v83 = vadd.f32 %v80, 1.0
    %v84 = vlog2.pop %v83
    %v85 = vmul.f32 %v84, 0.6931472
    %v86 = vmul.f32 -0.5, %v80
    %v87 = vadd.f32 %v86, 1.0
    %v88 = vmul.f32 %v87, %v80
    %v89 = vand.u32 2147483647, %v80
    %vm90 = vcmp.lt.f32.partialorder %v89, 0.0004427343
    %v91 = vsel %vm90, %v88, %v85
    %v92 = vadd.f32 %v82, 1.0
    %v93 = vlog2.pop %v92
    %v94 = vmul.f32 %v93, 0.6931472
    %v95 = vmul.f32 -0.5, %v82
    %v96 = vadd.f32 %v95, 1.0
    %v97 = vmul.f32 %v96, %v82
    %v98 = vand.u32 2147483647, %v82
    %vm99 = vcmp.lt.f32.partialorder %v98, 0.0004427343
    %v100 = vsel %vm99, %v97, %v94
    %v101 = vadd.f32 %v73, %v91
    %v102 = vadd.f32 %v74, %v100
    %v103 = vsub.f32 0.0, %v101
    %v104 = vsub.f32 0.0, %v102
    %v105 = vmul.f32 %v103, 1.442695
    %v106 = vpow.pop %v105
    %v107 = vmul.f32 %v104, 1.442695
    %v108 = vpow.pop %v107
    %v109 = vsub.f32 1.0, %v106
    %v110 = vsub.f32 1.0, %v108
    %v111 = vmul.f32 %v109, %v109
    %v112 = vmul.f32 %v110, %v110
    %v113 = vmul.f32 %v111, %v101
    %v114 = vmul.f32 %v112, %v102
    %s115 = sadd.s32 0, 0
    %p116 = scmp.lt.s32.totalorder %s115, 0
    // Predicated region
    $region22: #{tpu_custom_call.1} parent=1 // pred_check
      %p117 = pneg %p116
    $region23: #{tpu_custom_call.1} parent=1 // pred_check_branch
      %119 = sbr.rel (%p117) target = $region25
    $region24: #{tpu_custom_call.1} parent=1 // pred_region
      %v120 = vadd.f32 %v113, %v114
      %v121 = vld [vmem:[#allocation7] sm:$0xff]
      %v122 = vadd.f32 %v121, %v120
      %123 = vst [vmem:[#allocation7] sm:$0xff] %v122
    $region25: #{tpu_custom_call.1} parent=1 // pred_fallthru
      _
    %p124 = scmp.ge.s32.totalorder %s115, 0
    // Predicated region
    $region26: #{tpu_custom_call.1} parent=1 // pred_check
      %p125 = pneg %p124
    $region27: #{tpu_custom_call.1} parent=1 // pred_check_branch
      %127 = sbr.rel (%p125) target = $region29
    $region28: #{tpu_custom_call.1} parent=1 // pred_region
      %s128 = smul.u32 %s115, 16
      %v129 = vlaneseq
      %v130 = vshrl.u32 %v129, 7
      %v131 = vadd.s32 %v130, 8
      %v132 = vstv %s128
      %v133 = vadd.s32 %v130, %v132
      %v134 = vadd.s32 %v131, %v132
      %vm135 = vcmp.lt.s32.totalorder %v133, 16
      %vm136 = vcmp.lt.s32.totalorder %v134, 16
      %v137 = vsel %vm135, %v113, 0.0
      %v138 = vsel %vm136, %v114, 0.0
      %v139 = vadd.f32 %v137, %v138
      %v140 = vld [vmem:[#allocation7] sm:$0xff]
      %v141 = vadd.f32 %v140, %v139
      %142 = vst [vmem:[#allocation7] sm:$0xff] %v141
    $region29: #{tpu_custom_call.1} parent=1 // pred_fallthru
      _
    // Predicated region
    $region30: #{tpu_custom_call.1} parent=1 // pred_check
      _
    $region31: #{tpu_custom_call.1} parent=1 // pred_check_branch
      %144 = sbr.rel (0) target = $region33
    $region32: #{tpu_custom_call.1} parent=1 // pred_region
      %s146 = ssub.s32 128, 128
      %147 = vsyncadd [#allocation4], %s146
      %s149 = sshll.u32 [#allocation7], 4
      %s150 = int_to_ptr.vmem [resolvable:$true] %s149
      %152 = dma.vmem_to_hbm [thread:$0]  %s150, 128, %s2, [#allocation4]
    $region33: #{tpu_custom_call.1} parent=1 // pred_fallthru
      _
    // Predicated region
    $region34: #{tpu_custom_call.1} parent=1 // pred_check
      _
    $region35: #{tpu_custom_call.1} parent=1 // pred_check_branch
      %154 = sbr.rel (0) target = $region37
    $region36: #{tpu_custom_call.1} parent=1 // pred_region
      %155 = dma.done [#allocation4], 128
    $region37: #{tpu_custom_call.1} parent=1 // pred_fallthru
      _
    %156 = vsyncpa [#allocation3], 1
    %157 = vsyncpa [#allocation6], 1
    %158 = vsyncpa [#allocation4], 1

</llo_original>
